<compile_context>
chip_gen: v7x
topology: tpu7x:2x2x1
jax: 0.10.0
libtpu: 0.0.40
codegen_flags: <defaults>
</compile_context>

<pallas_src>
import functools
import math

import jax
import jax.numpy as jnp
from jax.experimental import pallas as pl
from jax.experimental.pallas import tpu as pltpu


_SQRT_HALF = 1.0 / math.sqrt(2.0)
_GELU_TANH_C = math.sqrt(2.0 / math.pi)


def _gelu_exact(x):
    # Matches torch.nn.GELU() default (approximate='none'): 0.5*x*(1+erf(x/sqrt(2)))
    return 0.5 * x * (1.0 + jax.lax.erf(x * _SQRT_HALF))


def _gelu_tanh(x):
    # torch.nn.GELU(approximate='tanh'); tanh runs on the (otherwise idle) EUP.
    return 0.5 * x * (1.0 + jnp.tanh(_GELU_TANH_C * (x + 0.044715 * x * x * x)))


def _move_predictor_kernel(x_ref, clsp_ref, w1x_ref, w2f_ref, w2t_ref,
                           b2f_ref, b2t_ref, from_ref, to_ref,
                           *, approximate_gelu=False):
    """One grid step: nb boards (= nb*64 token rows).

    x_ref    : [tm, E]        piece embeddings (input dtype; cast in-kernel)
    clsp_ref : [nb, 1, 2H]    cls @ W1_cls + b1, one row per board (f32)
    w1x_ref  : [E, 2H]        x-part of the fused first layer (compute dtype)
    w2f_ref  : [2H, 1]        from-head second layer, zero-padded rows H:2H
    w2t_ref  : [2H, 64]       to-head second layer,   zero-padded rows 0:H
    b2f_ref  : [1, 1]         from-head second-layer bias (f32)
    b2t_ref  : [1, 64]        to-head second-layer bias (f32)
    from_ref : [nb, 64, 1]    from-square scores (output dtype)
    to_ref   : [nb, 64, 64]   to-square scores (output dtype)
    """
    nb = clsp_ref.shape[0]
    tm = x_ref.shape[0]
    two_h = w1x_ref.shape[1]
    sq = tm // nb  # 64 squares per board
    compute_dtype = w1x_ref.dtype

    # Shared first layer for both heads; f32 accumulation on the MXU.
    h = jnp.dot(x_ref[...].astype(compute_dtype), w1x_ref[...],
                preferred_element_type=jnp.float32)

    # Per-board cls projection + first-layer bias (precomputed, f32).  The
    # leading-dim split/merge is along sublane-tile boundaries (64 % 8 == 0),
    # so it does not force a relayout.
    h3 = h.reshape(nb, sq, two_h) + clsp_ref[...]
    h3 = _gelu_tanh(h3) if approximate_gelu else _gelu_exact(h3)
    h = h3.reshape(tm, two_h).astype(compute_dtype)

    # Two small second-layer matmuls (weights zero-padded so no lane slicing
    # of h is needed).  f32 accumulation + f32 bias, cast once on store.
    frm = jnp.dot(h, w2f_ref[...], preferred_element_type=jnp.float32) + b2f_ref[...]
    to = jnp.dot(h, w2t_ref[...], preferred_element_type=jnp.float32) + b2t_ref[...]

    from_ref[...] = frm.reshape(from_ref.shape).astype(from_ref.dtype)
    to_ref[...] = to.reshape(to_ref.shape).astype(to_ref.dtype)


def _vmem_capacity_bytes():
    try:
        return int(pltpu.get_tpu_info().vmem_capacity_bytes)
    except Exception:
        return 64 * 1024 * 1024  # conservative: v7x per-TensorCore VMEM


def _choose_boards_per_tile(B, max_boards):
    """Largest divisor of B that is <= max_boards while keeping >= 4 grid steps
    (>= 2 per v7x TensorCore) when B allows it; nb=1 is the safe fallback."""
    if B >= 4:
        min_steps = 4
    elif B >= 2:
        min_steps = 2
    else:
        min_steps = 1
    best = 1
    for nb in range(1, B + 1):
        if B % nb:
            continue
        if nb > max_boards:
            break
        if nb != 1 and B // nb < min_steps:
            continue
        best = nb
    return best


def prepare_move_predictor_params(params, *, compute_dtype=jnp.bfloat16):
    """One-time parameter preprocessing (hoisted out of the forward call)."""
    w1f, w1t = params["w1f"], params["w1t"]
    in_dim, H = w1f.shape
    E = in_dim // 2

    w1 = jnp.concatenate([w1f, w1t], axis=1)                       # (2E, 2H)
    b1 = jnp.concatenate([params["b1f"], params["b1t"]], axis=1)   # (1, 2H)

    # Zero-padded second layers: h[:, :H] feeds the from-head, h[:, H:] the
    # to-head; padding with zeros keeps a single shared activation matrix.
    w2f_pad = jnp.concatenate(
        [params["w2f"].astype(jnp.float32), jnp.zeros((H, 1), jnp.float32)], axis=0)
    w2t_pad = jnp.concatenate(
        [jnp.zeros((H, 64), jnp.float32), params["w2t"].astype(jnp.float32)], axis=0)

    return {
        "compute_dtype": jnp.dtype(compute_dtype),
        "w1x": w1[:E].astype(compute_dtype),        # (E, 2H)
        "w1c": w1[E:].astype(jnp.float32),          # (E, 2H), kept f32
        "b1": b1.astype(jnp.float32),               # (1, 2H)
        "w2f": w2f_pad.astype(compute_dtype),       # (2H, 1)
        "w2t": w2t_pad.astype(compute_dtype),       # (2H, 64)
        "b2f": params["b2f"].astype(jnp.float32).reshape(1, 1),
        "b2t": params["b2t"].astype(jnp.float32).reshape(1, 64),
    }


def move_predictor_pallas(x, cls, prepared, *, out_dtype=None,
                          gelu_approximate=False, max_rows_per_tile=4096):
    """
    Args:
      x:        [B, 64, E] piece embeddings
      cls:      [B, E]     class token
      prepared: output of prepare_move_predictor_params
    Returns:
      from_scores: [B, 64]
      to_scores:   [B, 64, 64]
    """
    B, S, E = x.shape
    assert S == 64 and cls.shape == (B, E)

    w1x, w1c, b1 = prepared["w1x"], prepared["w1c"], prepared["b1"]
    w2f, w2t = prepared["w2f"], prepared["w2t"]
    b2f, b2t = prepared["b2f"], prepared["b2t"]
    two_h = w1x.shape[1]
    assert w1x.shape[0] == E
    compute_dtype = prepared["compute_dtype"]
    if out_dtype is None:
        out_dtype = x.dtype

    # Per-board cls projection + first-layer bias: tiny [B, 2H] f32 XLA matmul.
    cls_proj = (cls.astype(jnp.float32) @ w1c + b1).reshape(B, 1, two_h)

    M = B * S
    x2 = x.reshape(M, E)  # metadata-only reshape; dtype untouched (cast in-kernel)

    # --- VMEM-budget-driven tiling -------------------------------------------
    capacity = _vmem_capacity_bytes()
    budget = int(0.55 * capacity)
    isz_x = jnp.dtype(x.dtype).itemsize
    isz_c = jnp.dtype(compute_dtype).itemsize
    isz_o = jnp.dtype(out_dtype).itemsize
    # Double-buffered per-board tiles (x, clsp, from, to) + slack for the f32
    # intermediates (h, gelu temp) the compiler may spill.
    per_board = 2 * (S * E * isz_x + two_h * 4 + S * isz_o + S * 64 * isz_o)
    per_board += 2 * S * two_h * 4 + S * 64 * 4
    # Weight blocks are double-buffered by the default pipeliner -> count x2.
    fixed = 2 * ((E * two_h + two_h + two_h * 64) * isz_c + 65 * 4)

    max_boards = max(1, min((budget - fixed) // per_board, max_rows_per_tile // S))
    nb = _choose_boards_per_tile(B, max_boards)
    tm = nb * S
    grid = (B // nb,)
    # TODO(synk): pad B to a friendlier divisor when B is prime/odd and large
    # (nb silently falls back to 1 board per step, which is correct but slow).

    est_vmem = fixed + nb * per_board
    ckwargs = dict(dimension_semantics=("parallel",))
    if est_vmem > 12 * 1024 * 1024:
        # Clamp to physical VMEM (v7x: 64 MiB/TC) with ~25% headroom.
        ckwargs["vmem_limit_bytes"] = int(
            min(max(1.5 * est_vmem, 16 * 1024 * 1024), 0.75 * capacity))
    compiler_params = pltpu.CompilerParams(**ckwargs)

    kernel = functools.partial(_move_predictor_kernel,
                               approximate_gelu=bool(gelu_approximate))

    from3, to3 = pl.pallas_call(
        kernel,
        out_shape=(
            jax.ShapeDtypeStruct((B, S, 1), out_dtype),   # from-scores
            jax.ShapeDtypeStruct((B, S, S), out_dtype),   # to-scores
        ),
        grid_spec=pltpu.PrefetchScalarGridSpec(
            num_scalar_prefetch=0,
            grid=grid,
            in_specs=[
                pl.BlockSpec((tm, E), lambda i: (i, 0)),            # x rows
                pl.BlockSpec((nb, 1, two_h), lambda i: (i, 0, 0)),  # per-board cls proj
                pl.BlockSpec((E, two_h), lambda i: (0, 0)),         # W1 (x part)
                pl.BlockSpec((two_h, 1), lambda i: (0, 0)),         # W2 from (padded)
                pl.BlockSpec((two_h, 64), lambda i: (0, 0)),        # W2 to (padded)
                pl.BlockSpec((1, 1), lambda i: (0, 0)),             # b2 from
                pl.BlockSpec((1, 64), lambda i: (0, 0)),            # b2 to
            ],
            out_specs=(
                pl.BlockSpec((nb, S, 1), lambda i: (i, 0, 0)),
                pl.BlockSpec((nb, S, S), lambda i: (i, 0, 0)),
            ),
        ),
        compiler_params=compiler_params,
    )(x2, cls_proj, w1x, w2f, w2t, b2f, b2t)

    return from3.reshape(B, S), to3


def init_params(key, embed_dim, hidden_dim=None, dtype=jnp.float32):
    """Deterministic synthetic parameters matching the PyTorch module shapes.

    Weights are stored as [in_features, out_features] (i.e. W.T relative to
    nn.Linear), biases as [1, out_features].
    """
    if hidden_dim is None:
        hidden_dim = embed_dim
    in_dim = 2 * embed_dim
    ks = jax.random.split(key, 8)
    s = 0.05
    return {
        # from_head: Linear(2E, H), Linear(H, 1)
        "w1f": (jax.random.normal(ks[0], (in_dim, hidden_dim)) * s).astype(dtype),
        "b1f": (jax.random.normal(ks[1], (1, hidden_dim)) * s).astype(dtype),
        "w2f": (jax.random.normal(ks[2], (hidden_dim, 1)) * s).astype(dtype),
        "b2f": (jax.random.normal(ks[3], (1, 1)) * s).astype(dtype),
        # to_head: Linear(2E, H), Linear(H, 64)
        "w1t": (jax.random.normal(ks[4], (in_dim, hidden_dim)) * s).astype(dtype),
        "b1t": (jax.random.normal(ks[5], (1, hidden_dim)) * s).astype(dtype),
        "w2t": (jax.random.normal(ks[6], (hidden_dim, 64)) * s).astype(dtype),
        "b2t": (jax.random.normal(ks[7], (1, 64)) * s).astype(dtype),
    }


def _reference(x, cls, params):
    """Pure-JAX reference of the PyTorch forward for a sanity check."""
    B, S, E = x.shape
    xc = jnp.concatenate(
        [x, jnp.broadcast_to(cls[:, None, :], (B, S, E))], axis=-1)
    hf = _gelu_exact(xc @ params["w1f"] + params["b1f"])
    f = (hf @ params["w2f"] + params["b2f"])[..., 0]
    ht = _gelu_exact(xc @ params["w1t"] + params["b1t"])
    t = ht @ params["w2t"] + params["b2t"]
    return f, t


if __name__ == "__main__":
    B, S, E, H = 2, 64, 32, 32  # batch, squares (fixed 64), embed_dim, hidden_dim

    key = jax.random.PRNGKey(0)
    kx, kc, kp = jax.random.split(key, 3)
    x = jax.random.normal(kx, (B, S, E), dtype=jnp.float32)
    cls = jax.random.normal(kc, (B, E), dtype=jnp.float32)
    params = init_params(kp, E, H)
    f_ref, t_ref = _reference(x, cls, params)

    # f32 compute path: must closely match the exact (erf-GELU) reference.
    prep_f32 = prepare_move_predictor_params(params, compute_dtype=jnp.float32)
    f32_from, f32_to = jax.block_until_ready(move_predictor_pallas(x, cls, prep_f32))
    assert f32_from.shape == (B, 64)
    assert f32_to.shape == (B, 64, 64)
    assert jnp.allclose(f32_from, f_ref, atol=1e-4, rtol=1e-4)
    assert jnp.allclose(f32_to, t_ref, atol=1e-4, rtol=1e-4)

    # Default bf16 compute path (f32 inputs, in-kernel cast): looser tolerance.
    prep = prepare_move_predictor_params(params)  # compute_dtype=bf16
    f_bf, t_bf = jax.block_until_ready(move_predictor_pallas(x, cls, prep))
    assert jnp.allclose(f_bf, f_ref, atol=5e-2, rtol=5e-2)
    assert jnp.allclose(t_bf, t_ref, atol=5e-2, rtol=5e-2)

    # Intended fast path: bf16 activations end-to-end (halves the x HBM read).
    x_bf = x.astype(jnp.bfloat16)
    cls_bf = cls.astype(jnp.bfloat16)
    f_bb, t_bb = jax.block_until_ready(move_predictor_pallas(x_bf, cls_bf, prep))
    assert jnp.allclose(f_bb.astype(jnp.float32), f_ref, atol=5e-2, rtol=5e-2)
    assert jnp.allclose(t_bb.astype(jnp.float32), t_ref, atol=5e-2, rtol=5e-2)

    print("KERNEL_OK")
</pallas_src>

<mosaic_0001>
module attributes {stable_mosaic.version = 11 : i64} {
  func.func @_move_predictor_kernel(%arg0: i32, %arg1: memref<64x32xf32, #tpu.memory_space<vmem>>, %arg2: memref<1x1x64xf32, #tpu.memory_space<vmem>>, %arg3: memref<32x64xf32, #tpu.memory_space<vmem>>, %arg4: memref<64x1xf32, #tpu.memory_space<vmem>>, %arg5: memref<64x64xf32, #tpu.memory_space<vmem>>, %arg6: memref<1x1xf32, #tpu.memory_space<vmem>>, %arg7: memref<1x64xf32, #tpu.memory_space<vmem>>, %arg8: memref<1x64x1xf32, #tpu.memory_space<vmem>>, %arg9: memref<1x64x64xf32, #tpu.memory_space<vmem>>) attributes {dimension_semantics = [#tpu.dimension_semantics<parallel>], iteration_bounds = array<i64: 2>, scalar_prefetch = 0 : i64, scratch_operands = 0 : i64, tpu.core_type = #tpu.core_type<tc>, window_params = [{transform_indices = @transform_0, window_bounds = array<i64: 64, 32>}, {transform_indices = @transform_1, window_bounds = array<i64: 1, 1, 64>}, {pipeline_mode = #tpu.pipeline_mode<synchronous>, transform_indices = @transform_2, window_bounds = array<i64: 32, 64>}, {pipeline_mode = #tpu.pipeline_mode<synchronous>, transform_indices = @transform_3, window_bounds = array<i64: 64, 1>}, {pipeline_mode = #tpu.pipeline_mode<synchronous>, transform_indices = @transform_4, window_bounds = array<i64: 64, 64>}, {pipeline_mode = #tpu.pipeline_mode<synchronous>, transform_indices = @transform_5, window_bounds = array<i64: 1, 1>}, {pipeline_mode = #tpu.pipeline_mode<synchronous>, transform_indices = @transform_6, window_bounds = array<i64: 1, 64>}, {transform_indices = @transform_7, window_bounds = array<i64: 1, 64, 1>}, {transform_indices = @transform_8, window_bounds = array<i64: 1, 64, 64>}]} {
    %c0 = arith.constant 0 : index
    %c0_0 = arith.constant 0 : index
    %0 = vector.load %arg1[%c0, %c0_0] : memref<64x32xf32, #tpu.memory_space<vmem>>, vector<64x32xf32>
    %c0_1 = arith.constant 0 : index
    %c0_2 = arith.constant 0 : index
    %1 = vector.load %arg3[%c0_1, %c0_2] : memref<32x64xf32, #tpu.memory_space<vmem>>, vector<32x64xf32>
    %cst = arith.constant dense<0.000000e+00> : vector<64x64xf32>
    %2 = tpu.matmul %0, %1, %cst {dimension_numbers = #tpu.dot_dimension_numbers<[1], [0], [0], [1], [0, 0, 1, 1], [], []>} : vector<64x32xf32>, vector<32x64xf32>, vector<64x64xf32> -> vector<64x64xf32>
    %3 = vector.shape_cast %2 : vector<64x64xf32> to vector<1x64x64xf32>
    %c0_3 = arith.constant 0 : index
    %c0_4 = arith.constant 0 : index
    %c0_5 = arith.constant 0 : index
    %4 = vector.load %arg2[%c0_3, %c0_4, %c0_5] : memref<1x1x64xf32, #tpu.memory_space<vmem>>, vector<1x1x64xf32>
    %5 = vector.broadcast %4 : vector<1x1x64xf32> to vector<1x64x64xf32>
    %6 = arith.addf %3, %5 : vector<1x64x64xf32>
    %cst_6 = arith.constant 5.000000e-01 : f32
    %7 = vector.broadcast %cst_6 : f32 to vector<1x64x64xf32>
    %8 = arith.mulf %7, %6 : vector<1x64x64xf32>
    %cst_7 = arith.constant 0.707106769 : f32
    %9 = vector.broadcast %cst_7 : f32 to vector<1x64x64xf32>
    %10 = arith.mulf %6, %9 : vector<1x64x64xf32>
    %11 = math.erf %10 : vector<1x64x64xf32>
    %cst_8 = arith.constant 1.000000e+00 : f32
    %12 = vector.broadcast %cst_8 : f32 to vector<1x64x64xf32>
    %13 = arith.addf %12, %11 : vector<1x64x64xf32>
    %14 = arith.mulf %8, %13 : vector<1x64x64xf32>
    %15 = vector.shape_cast %14 : vector<1x64x64xf32> to vector<64x64xf32>
    %c0_9 = arith.constant 0 : index
    %c0_10 = arith.constant 0 : index
    %16 = vector.load %arg4[%c0_9, %c0_10] : memref<64x1xf32, #tpu.memory_space<vmem>>, vector<64x1xf32>
    %cst_11 = arith.constant dense<0.000000e+00> : vector<64x1xf32>
    %17 = tpu.matmul %15, %16, %cst_11 {dimension_numbers = #tpu.dot_dimension_numbers<[1], [0], [0], [1], [0, 0, 1, 1], [], []>} : vector<64x64xf32>, vector<64x1xf32>, vector<64x1xf32> -> vector<64x1xf32>
    %c0_12 = arith.constant 0 : index
    %c0_13 = arith.constant 0 : index
    %18 = vector.load %arg6[%c0_12, %c0_13] : memref<1x1xf32, #tpu.memory_space<vmem>>, vector<1x1xf32>
    %19 = vector.broadcast %18 : vector<1x1xf32> to vector<64x1xf32>
    %20 = arith.addf %17, %19 : vector<64x1xf32>
    %c0_14 = arith.constant 0 : index
    %c0_15 = arith.constant 0 : index
    %21 = vector.load %arg5[%c0_14, %c0_15] : memref<64x64xf32, #tpu.memory_space<vmem>>, vector<64x64xf32>
    %cst_16 = arith.constant dense<0.000000e+00> : vector<64x64xf32>
    %22 = tpu.matmul %15, %21, %cst_16 {dimension_numbers = #tpu.dot_dimension_numbers<[1], [0], [0], [1], [0, 0, 1, 1], [], []>} : vector<64x64xf32>, vector<64x64xf32>, vector<64x64xf32> -> vector<64x64xf32>
    %c0_17 = arith.constant 0 : index
    %c0_18 = arith.constant 0 : index
    %23 = vector.load %arg7[%c0_17, %c0_18] : memref<1x64xf32, #tpu.memory_space<vmem>>, vector<1x64xf32>
    %24 = vector.broadcast %23 : vector<1x64xf32> to vector<64x64xf32>
    %25 = arith.addf %22, %24 : vector<64x64xf32>
    %26 = vector.shape_cast %20 : vector<64x1xf32> to vector<1x64x1xf32>
    %c0_19 = arith.constant 0 : index
    %c0_20 = arith.constant 0 : index
    %c0_21 = arith.constant 0 : index
    %27 = vector.load %arg8[%c0_19, %c0_20, %c0_21] : memref<1x64x1xf32, #tpu.memory_space<vmem>>, vector<1x64x1xf32>
    tpu.vector_store %arg8[%c0_19, %c0_20, %c0_21], %26 {strides = array<i32>} : memref<1x64x1xf32, #tpu.memory_space<vmem>>, vector<1x64x1xf32>,
    %28 = vector.shape_cast %25 : vector<64x64xf32> to vector<1x64x64xf32>
    %c0_22 = arith.constant 0 : index
    %c0_23 = arith.constant 0 : index
    %c0_24 = arith.constant 0 : index
    %29 = vector.load %arg9[%c0_22, %c0_23, %c0_24] : memref<1x64x64xf32, #tpu.memory_space<vmem>>, vector<1x64x64xf32>
    tpu.vector_store %arg9[%c0_22, %c0_23, %c0_24], %28 {strides = array<i32>} : memref<1x64x64xf32, #tpu.memory_space<vmem>>, vector<1x64x64xf32>,
    return
  }
  func.func @transform_0(%arg0: i32) -> (i32, i32) {
    %c0_i32 = arith.constant 0 : i32
    %c0_i32_0 = arith.constant 0 : i32
    return %arg0, %c0_i32 : i32, i32
  }
  func.func @transform_1(%arg0: i32) -> (i32, i32, i32) {
    %c0_i32 = arith.constant 0 : i32
    %c0_i32_0 = arith.constant 0 : i32
    %c0_i32_1 = arith.constant 0 : i32
    return %arg0, %c0_i32, %c0_i32_0 : i32, i32, i32
  }
  func.func @transform_2(%arg0: i32) -> (i32, i32) {
    %c0_i32 = arith.constant 0 : i32
    %c0_i32_0 = arith.constant 0 : i32
    %c0_i32_1 = arith.constant 0 : i32
    return %c0_i32, %c0_i32_0 : i32, i32
  }
  func.func @transform_3(%arg0: i32) -> (i32, i32) {
    %c0_i32 = arith.constant 0 : i32
    %c0_i32_0 = arith.constant 0 : i32
    %c0_i32_1 = arith.constant 0 : i32
    return %c0_i32, %c0_i32_0 : i32, i32
  }
  func.func @transform_4(%arg0: i32) -> (i32, i32) {
    %c0_i32 = arith.constant 0 : i32
    %c0_i32_0 = arith.constant 0 : i32
    %c0_i32_1 = arith.constant 0 : i32
    return %c0_i32, %c0_i32_0 : i32, i32
  }
  func.func @transform_5(%arg0: i32) -> (i32, i32) {
    %c0_i32 = arith.constant 0 : i32
    %c0_i32_0 = arith.constant 0 : i32
    %c0_i32_1 = arith.constant 0 : i32
    return %c0_i32, %c0_i32_0 : i32, i32
  }
  func.func @transform_6(%arg0: i32) -> (i32, i32) {
    %c0_i32 = arith.constant 0 : i32
    %c0_i32_0 = arith.constant 0 : i32
    %c0_i32_1 = arith.constant 0 : i32
    return %c0_i32, %c0_i32_0 : i32, i32
  }
  func.func @transform_7(%arg0: i32) -> (i32, i32, i32) {
    %c0_i32 = arith.constant 0 : i32
    %c0_i32_0 = arith.constant 0 : i32
    %c0_i32_1 = arith.constant 0 : i32
    return %arg0, %c0_i32, %c0_i32_0 : i32, i32, i32
  }
  func.func @transform_8(%arg0: i32) -> (i32, i32, i32) {
    %c0_i32 = arith.constant 0 : i32
    %c0_i32_0 = arith.constant 0 : i32
    %c0_i32_1 = arith.constant 0 : i32
    return %arg0, %c0_i32, %c0_i32_0 : i32, i32, i32
  }
}

</mosaic_0001>

<llo_original>
// kernel: tpu_custom_call.1
$region0: #{tpu_custom_call.1}
  #allocation0 [shape = 'u32[]', space=smem, size = 0x4, offset = 0x4, fixed_abs, tag = 'smem constant byte address 0x4 - core index']
  #allocation1 [shape = 'u32[144,128]{1,0:T(1,128)}', space=vmem, size = 0x12000, scoped, tag = 'internal scratch']
  #allocation2 [shape = 'f32[1,1]{1,0:T(1,128)S(1)}', space=vmem, size = 0x200, scoped, tag = 'scoped memory for tpu_custom_call.1']
  %s0 = inlined_call_operand.vmem [shape: f32[128,32], index: 0, kind: input, shape index: {}]
  %s1 = inlined_call_operand.vmem [shape: f32[2,1,64], index: 1, kind: input, shape index: {}]
  %s2 = inlined_call_operand.vmem [shape: f32[32,64], index: 2, kind: input, shape index: {}]
  %s3 = inlined_call_operand.vmem [shape: f32[64,1], index: 3, kind: input, shape index: {}]
  %s4 = inlined_call_operand.vmem [shape: f32[64,64], index: 4, kind: input, shape index: {}]
  %s5 = inlined_call_operand.<no memory space> [shape: f32[1,1], index: 5, kind: input, shape index: {}]
  %s6 = inlined_call_operand.vmem [shape: f32[1,64], index: 6, kind: input, shape index: {}]
  %s7 = inlined_call_operand.vmem [shape: f32[2,64,1], index: 7, kind: output, shape index: {0}]
  %s8 = inlined_call_operand.hbm [shape: f32[2,64,64], index: 8, kind: output, shape index: {1}]
  %9 = xla_tuple %s7, %s8
  %s10 = sld [smem:[#allocation0]]
  $region69: #{tpu_custom_call.1} parent=0
    _
  %s12 = ssub.s32 1, %s10
  %s13 = scalar_select 0, %s12, %s10
  %v14 = vstv %s5
  %15 = vst [vmem:[#allocation2] sm:$0x1] %v14
  $region1: #{tpu_custom_call.1} parent=0
    #allocation3 [shape = 'u8[65536]{0}', space=vmem, size = 0x10000, scoped, tag = 'output window, operand 1']
    #allocation4 [shape = 's32[2]{0}', space=sflag, size = 0x8, scoped, tag = 'scoped memory for tpu_custom_call.1']
    %16 = vsyncpa [#allocation4], 0
    %s17 = scalar_lea.sflag [#allocation4], 1
    %18 = vsyncpa %s17, 0
    loop: start=0, step=1, limit=4
    $region2: #{tpu_custom_call.1} parent=1 // loop_pre_header
      _
    $region3: #{tpu_custom_call.1} parent=1 // loop_header
      %s20 = sphi 0, %s24
      %p21 = scmp.ge.s32.totalorder %s20, 4
      %s30 = sphi 0, %s32
      %s33 = sphi 0, %s30
      %s34 = sphi 0, %s33
      %s50 = sphi 0, %s34
      %s56 = sphi 0, %s58
      %s59 = sphi 0, %s56
      %s60 = sphi 0, %s59
      %s76 = sphi 0, %s60
      %s80 = sphi 0, %s80
      %s82 = sphi 0, %s80
      %s83 = sphi 0, %s82
      %s97 = sphi 0, %s83
      %s101 = sphi 0, %s101
      %s103 = sphi 0, %s101
      %s104 = sphi 0, %s103
      %s118 = sphi 0, %s104
      %s122 = sphi 0, %s122
      %s124 = sphi 0, %s122
      %s125 = sphi 0, %s124
      %s139 = sphi 0, %s125
      %s143 = sphi 0, %s143
      %s145 = sphi 0, %s143
      %s146 = sphi 0, %s145
      %s160 = sphi 0, %s146
      %s164 = sphi 0, %s164
      %s166 = sphi 0, %s164
      %s167 = sphi 0, %s166
      %s181 = sphi 0, %s167
      %s187 = sphi 0, %s189
      %s190 = sphi 0, %s187
      %s191 = sphi 0, %s190
      %s207 = sphi 0, %s191
      %s213 = sphi 0, %s215
      %s216 = sphi 0, %s213
      %s217 = sphi 0, %s216
      %s233 = sphi 0, %s217
    $region4: #{tpu_custom_call.1} parent=1 // loop_header_branch
      %23 = sbr.rel (%p21) target = $region8
    $region5: #{tpu_custom_call.1} parent=1 // loop_body
      %s25 = ssub.s32 %s20, 1
      %s26 = ssub.s32 %s20, 2
      %s27 = sadd.s32 %s20, 1
      %s28 = ssub.s32 %s20, %s27
      %p29 = scmp.eq.s32.totalorder %s28, 0
      %s31 = sadd.s32 %s30, 1
      %s32 = scalar_select %p29, %s30, %s31
      %p35 = pneg %p29
      %p36 = scmp.eq.s32.totalorder %s20, 1
      %p37 = por %p35, %p36
      %p38 = scmp.ne.s32.totalorder %s30, %s33
      %p39 = scmp.eq.s32.totalorder %s20, 0
      %p40 = por %p38, %p39
      %p41 = scmp.ne.s32.totalorder %s30, %s33
      %p42 = scmp.eq.s32.totalorder %s25, 1
      %p43 = por %p41, %p42
      %p44 = scmp.ne.s32.totalorder %s33, %s34
      %p45 = scmp.eq.s32.totalorder %s25, 0
      %p46 = por %p44, %p45
      %p47 = scmp.ne.s32.totalorder %s33, %s34
      %p48 = scmp.eq.s32.totalorder %s26, 1
      %p49 = por %p47, %p48
      %p51 = scmp.ne.s32.totalorder %s34, %s50
      %p52 = scmp.eq.s32.totalorder %s26, 0
      %p53 = por %p51, %p52
      %s54 = ssub.s32 %s20, %s27
      %p55 = scmp.eq.s32.totalorder %s54, 0
      %s57 = sadd.s32 %s56, 1
      %s58 = scalar_select %p55, %s56, %s57
      %p61 = pneg %p55
      %p62 = scmp.eq.s32.totalorder %s20, 1
      %p63 = por %p61, %p62
      %p64 = scmp.ne.s32.totalorder %s56, %s59
      %p65 = scmp.eq.s32.totalorder %s20, 0
      %p66 = por %p64, %p65
      %p67 = scmp.ne.s32.totalorder %s56, %s59
      %p68 = scmp.eq.s32.totalorder %s25, 1
      %p69 = por %p67, %p68
      %p70 = scmp.ne.s32.totalorder %s59, %s60
      %p71 = scmp.eq.s32.totalorder %s25, 0
      %p72 = por %p70, %p71
      %p73 = scmp.ne.s32.totalorder %s59, %s60
      %p74 = scmp.eq.s32.totalorder %s26, 1
      %p75 = por %p73, %p74
      %p77 = scmp.ne.s32.totalorder %s60, %s76
      %p78 = scmp.eq.s32.totalorder %s26, 0
      %p79 = por %p77, %p78
      %s81 = sadd.s32 %s80, 1
      %p84 = scmp.eq.s32.totalorder %s20, 1
      %p85 = scmp.ne.s32.totalorder %s80, %s82
      %p86 = scmp.eq.s32.totalorder %s20, 0
      %p87 = por %p85, %p86
      %p88 = scmp.ne.s32.totalorder %s80, %s82
      %p89 = scmp.eq.s32.totalorder %s25, 1
      %p90 = por %p88, %p89
      %p91 = scmp.ne.s32.totalorder %s82, %s83
      %p92 = scmp.eq.s32.totalorder %s25, 0
      %p93 = por %p91, %p92
      %p94 = scmp.ne.s32.totalorder %s82, %s83
      %p95 = scmp.eq.s32.totalorder %s26, 1
      %p96 = por %p94, %p95
      %p98 = scmp.ne.s32.totalorder %s83, %s97
      %p99 = scmp.eq.s32.totalorder %s26, 0
      %p100 = por %p98, %p99
      %s102 = sadd.s32 %s101, 1
      %p105 = scmp.eq.s32.totalorder %s20, 1
      %p106 = scmp.ne.s32.totalorder %s101, %s103
      %p107 = scmp.eq.s32.totalorder %s20, 0
      %p108 = por %p106, %p107
      %p109 = scmp.ne.s32.totalorder %s101, %s103
      %p110 = scmp.eq.s32.totalorder %s25, 1
      %p111 = por %p109, %p110
      %p112 = scmp.ne.s32.totalorder %s103, %s104
      %p113 = scmp.eq.s32.totalorder %s25, 0
      %p114 = por %p112, %p113
      %p115 = scmp.ne.s32.totalorder %s103, %s104
      %p116 = scmp.eq.s32.totalorder %s26, 1
      %p117 = por %p115, %p116
      %p119 = scmp.ne.s32.totalorder %s104, %s118
      %p120 = scmp.eq.s32.totalorder %s26, 0
      %p121 = por %p119, %p120
      %s123 = sadd.s32 %s122, 1
      %p126 = scmp.eq.s32.totalorder %s20, 1
      %p127 = scmp.ne.s32.totalorder %s122, %s124
      %p128 = scmp.eq.s32.totalorder %s20, 0
      %p129 = por %p127, %p128
      %p130 = scmp.ne.s32.totalorder %s122, %s124
      %p131 = scmp.eq.s32.totalorder %s25, 1
      %p132 = por %p130, %p131
      %p133 = scmp.ne.s32.totalorder %s124, %s125
      %p134 = scmp.eq.s32.totalorder %s25, 0
      %p135 = por %p133, %p134
      %p136 = scmp.ne.s32.totalorder %s124, %s125
      %p137 = scmp.eq.s32.totalorder %s26, 1
      %p138 = por %p136, %p137
      %p140 = scmp.ne.s32.totalorder %s125, %s139
      %p141 = scmp.eq.s32.totalorder %s26, 0
      %p142 = por %p140, %p141
      %s144 = sadd.s32 %s143, 1
      %p147 = scmp.eq.s32.totalorder %s20, 1
      %p148 = scmp.ne.s32.totalorder %s143, %s145
      %p149 = scmp.eq.s32.totalorder %s20, 0
      %p150 = por %p148, %p149
      %p151 = scmp.ne.s32.totalorder %s143, %s145
      %p152 = scmp.eq.s32.totalorder %s25, 1
      %p153 = por %p151, %p152
      %p154 = scmp.ne.s32.totalorder %s145, %s146
      %p155 = scmp.eq.s32.totalorder %s25, 0
      %p156 = por %p154, %p155
      %p157 = scmp.ne.s32.totalorder %s145, %s146
      %p158 = scmp.eq.s32.totalorder %s26, 1
      %p159 = por %p157, %p158
      %p161 = scmp.ne.s32.totalorder %s146, %s160
      %p162 = scmp.eq.s32.totalorder %s26, 0
      %p163 = por %p161, %p162
      %s165 = sadd.s32 %s164, 1
      %p168 = scmp.eq.s32.totalorder %s20, 1
      %p169 = scmp.ne.s32.totalorder %s164, %s166
      %p170 = scmp.eq.s32.totalorder %s20, 0
      %p171 = por %p169, %p170
      %p172 = scmp.ne.s32.totalorder %s164, %s166
      %p173 = scmp.eq.s32.totalorder %s25, 1
      %p174 = por %p172, %p173
      %p175 = scmp.ne.s32.totalorder %s166, %s167
      %p176 = scmp.eq.s32.totalorder %s25, 0
      %p177 = por %p175, %p176
      %p178 = scmp.ne.s32.totalorder %s166, %s167
      %p179 = scmp.eq.s32.totalorder %s26, 1
      %p180 = por %p178, %p179
      %p182 = scmp.ne.s32.totalorder %s167, %s181
      %p183 = scmp.eq.s32.totalorder %s26, 0
      %p184 = por %p182, %p183
      %s185 = ssub.s32 %s20, %s27
      %p186 = scmp.eq.s32.totalorder %s185, 0
      %s188 = sadd.s32 %s187, 1
      %s189 = scalar_select %p186, %s187, %s188
      %p192 = pneg %p186
      %p193 = scmp.eq.s32.totalorder %s20, 1
      %p194 = por %p192, %p193
      %p195 = scmp.ne.s32.totalorder %s187, %s190
      %p196 = scmp.eq.s32.totalorder %s20, 0
      %p197 = por %p195, %p196
      %p198 = scmp.ne.s32.totalorder %s187, %s190
      %p199 = scmp.eq.s32.totalorder %s25, 1
      %p200 = por %p198, %p199
      %p201 = scmp.ne.s32.totalorder %s190, %s191
      %p202 = scmp.eq.s32.totalorder %s25, 0
      %p203 = por %p201, %p202
      %p204 = scmp.ne.s32.totalorder %s190, %s191
      %p205 = scmp.eq.s32.totalorder %s26, 1
      %p206 = por %p204, %p205
      %p208 = scmp.ne.s32.totalorder %s191, %s207
      %p209 = scmp.eq.s32.totalorder %s26, 0
      %p210 = por %p208, %p209
      %s211 = ssub.s32 %s20, %s27
      %p212 = scmp.eq.s32.totalorder %s211, 0
      %s214 = sadd.s32 %s213, 1
      %s215 = scalar_select %p212, %s213, %s214
      %p218 = pneg %p212
      %p219 = scmp.eq.s32.totalorder %s20, 1
      %p220 = por %p218, %p219
      %p221 = scmp.ne.s32.totalorder %s213, %s216
      %p222 = scmp.eq.s32.totalorder %s20, 0
      %p223 = por %p221, %p222
      %p224 = scmp.ne.s32.totalorder %s213, %s216
      %p225 = scmp.eq.s32.totalorder %s25, 1
      %p226 = por %p224, %p225
      %p227 = scmp.ne.s32.totalorder %s216, %s217
      %p228 = scmp.eq.s32.totalorder %s25, 0
      %p229 = por %p227, %p228
      %p230 = scmp.ne.s32.totalorder %s216, %s217
      %p231 = scmp.eq.s32.totalorder %s26, 1
      %p232 = por %p230, %p231
      %p234 = scmp.ne.s32.totalorder %s217, %s233
      %p235 = scmp.eq.s32.totalorder %s26, 0
      %p236 = por %p234, %p235
      %p237 = scmp.le.s32.totalorder 1, %s20
      %p238 = scmp.lt.s32.totalorder %s20, 3
      %p239 = pnand %p237, %p238
      %p240 = pneg %p239
      // Predicated region
      $region9: #{tpu_custom_call.1} parent=5 // pred_check
        _
      $region10: #{tpu_custom_call.1} parent=5 // pred_check_branch
        %242 = sbr.rel (%p239) target = $region12
      $region11: #{tpu_custom_call.1} parent=5 // pred_region
        %s243 = ssub.s32 %s20, 1
        // Predicated region
        $region13: #{tpu_custom_call.1} parent=11 // pred_check
          %p244 = pneg %p93
        $region14: #{tpu_custom_call.1} parent=11 // pred_check_branch
          %246 = sbr.rel (%p244) target = $region16
        $region15: #{tpu_custom_call.1} parent=11 // pred_region
          _
        $region16: #{tpu_custom_call.1} parent=11 // pred_fallthru
          _
        // Predicated region
        $region17: #{tpu_custom_call.1} parent=11 // pred_check
          %p247 = pneg %p114
        $region18: #{tpu_custom_call.1} parent=11 // pred_check_branch
          %249 = sbr.rel (%p247) target = $region20
        $region19: #{tpu_custom_call.1} parent=11 // pred_region
          _
        $region20: #{tpu_custom_call.1} parent=11 // pred_fallthru
          _
        // Predicated region
        $region21: #{tpu_custom_call.1} parent=11 // pred_check
          %p250 = pneg %p135
        $region22: #{tpu_custom_call.1} parent=11 // pred_check_branch
          %252 = sbr.rel (%p250) target = $region24
        $region23: #{tpu_custom_call.1} parent=11 // pred_region
          _
        $region24: #{tpu_custom_call.1} parent=11 // pred_fallthru
          _
        // Predicated region
        $region25: #{tpu_custom_call.1} parent=11 // pred_check
          %p253 = pneg %p156
        $region26: #{tpu_custom_call.1} parent=11 // pred_check_branch
          %255 = sbr.rel (%p253) target = $region28
        $region27: #{tpu_custom_call.1} parent=11 // pred_region
          _
        $region28: #{tpu_custom_call.1} parent=11 // pred_fallthru
          _
        // Predicated region
        $region29: #{tpu_custom_call.1} parent=11 // pred_check
          %p256 = pneg %p177
        $region30: #{tpu_custom_call.1} parent=11 // pred_check_branch
          %258 = sbr.rel (%p256) target = $region32
        $region31: #{tpu_custom_call.1} parent=11 // pred_region
          _
        $region32: #{tpu_custom_call.1} parent=11 // pred_fallthru
          _
      $region12: #{tpu_custom_call.1} parent=5 // pred_fallthru
        _
      %p259 = scmp.lt.s32.totalorder %s20, 2
      // Predicated region
      $region33: #{tpu_custom_call.1} parent=5 // pred_check
        %p260 = pneg %p259
      $region34: #{tpu_custom_call.1} parent=5 // pred_check_branch
        %262 = sbr.rel (%p260) target = $region36
      $region35: #{tpu_custom_call.1} parent=5 // pred_region
        // Predicated region
        $region37: #{tpu_custom_call.1} parent=35 // pred_check
          %p263 = pneg %p40
        $region38: #{tpu_custom_call.1} parent=35 // pred_check_branch
          %265 = sbr.rel (%p263) target = $region40
        $region39: #{tpu_custom_call.1} parent=35 // pred_region
          %s266 = smul.u32 8, %s20
          %p267 = scmp.lt.s32.totalorder %s266, 15
          %s268 = scalar_select %p267, %s266, 15
          %s269 = smul.addr %s268, 8
          %s270 = scalar_lea.vmem %s0, %s269
          %s271 = smul.u32 8, %s20
        $region40: #{tpu_custom_call.1} parent=35 // pred_fallthru
          _
        // Predicated region
        $region41: #{tpu_custom_call.1} parent=35 // pred_check
          %p272 = pneg %p66
        $region42: #{tpu_custom_call.1} parent=35 // pred_check_branch
          %274 = sbr.rel (%p272) target = $region44
        $region43: #{tpu_custom_call.1} parent=35 // pred_region
          %p275 = scmp.lt.s32.totalorder %s20, 1
          %s276 = scalar_select %p275, %s20, 1
          %s277 = scalar_lea.vmem %s1, %s276
        $region44: #{tpu_custom_call.1} parent=35 // pred_fallthru
          _
      $region36: #{tpu_custom_call.1} parent=5 // pred_fallthru
        _
      %p278 = scmp.le.s32.totalorder 1, %s20
      %p279 = scmp.lt.s32.totalorder %s20, 3
      %p280 = pnand %p278, %p279
      %p281 = pneg %p280
      // Predicated region
      $region45: #{tpu_custom_call.1} parent=5 // pred_check
        _
      $region46: #{tpu_custom_call.1} parent=5 // pred_check_branch
        %283 = sbr.rel (%p280) target = $region48
      $region47: #{tpu_custom_call.1} parent=5 // pred_region
        %s284 = ssub.s32 %s20, 1
        %s285 = smul.u32 8, %s25
        %p286 = scmp.lt.s32.totalorder %s285, 15
        %s287 = scalar_select %p286, %s285, 15
        %s288 = smul.addr %s287, 8
        %s289 = scalar_lea.vmem %s0, %s288
        %p290 = pneg %p46
        %p291 = pneg %p43
        %p292 = scmp.lt.s32.totalorder %s25, 1
        %s293 = scalar_select %p292, %s25, 1
        %s294 = scalar_lea.vmem %s1, %s293
        %p295 = pneg %p72
        %p296 = pneg %p69
        %p297 = pneg %p93
        %p298 = pneg %p90
        %p299 = pneg %p114
        %p300 = pneg %p111
        %p301 = pneg %p135
        %p302 = pneg %p132
        %p303 = pneg %p156
        %p304 = pneg %p153
        %p305 = pneg %p177
        %p306 = pneg %p174
        %p307 = pneg %p203
        %p308 = pneg %p200
        %p309 = scmp.lt.s32.totalorder %s25, 1
        %s310 = scalar_select %p309, %s25, 1
        %s311 = smul.addr %s310, 8
        %s312 = smul.addr %s311, 8
        %s313 = scalar_lea.vmem %s7, %s312
        %p314 = pneg %p229
        %p315 = pneg %p226
        %s316 = sand.u32 %s216, 1
        %s317 = scalar_lea.sflag [#allocation4], %s316
        %s318 = sand.u32 %s216, 1
        %s319 = smul.addr %s318, 64
        %s320 = scalar_lea.vmem [#allocation3], %s319
        %s321 = smul.u32 8, %s25
        %p322 = scmp.lt.s32.totalorder %s321, 15
        %s323 = scalar_select %p322, %s321, 15
        %s324 = smul.addr %s323, 8
        %s325 = scalar_lea.vmem %s0, %s324
        %s326 = smul.u32 8, %s25
        %p327 = scmp.lt.s32.totalorder %s25, 1
        %s328 = scalar_select %p327, %s25, 1
        %s329 = scalar_lea.vmem %s1, %s328
        %p330 = scmp.lt.s32.totalorder %s25, 1
        %s331 = scalar_select %p330, %s25, 1
        %s332 = smul.addr %s331, 8
        %s333 = smul.addr %s332, 8
        %s334 = scalar_lea.vmem %s7, %s333
        %v335 = vld [vmem:[%s325] sm:$0xff]
        %v336 = vld [vmem:[%s325 + $0x8] sm:$0xff]
        %v337 = vld [vmem:[%s325 + $0x10] sm:$0xff]
        %v338 = vld [vmem:[%s325 + $0x18] sm:$0xff]
        %v339 = vld [vmem:[%s325 + $0x20] sm:$0xff]
        %v340 = vld [vmem:[%s325 + $0x28] sm:$0xff]
        %v341 = vld [vmem:[%s325 + $0x30] sm:$0xff]
        %v342 = vld [vmem:[%s325 + $0x38] sm:$0xff]
        %v343 = vld [vmem:[%s2] sm:$0xff]
        %v344 = vld [vmem:[%s2 + $0x8] sm:$0xff]
        %v345 = vld [vmem:[%s2 + $0x10] sm:$0xff]
        %v346 = vld [vmem:[%s2 + $0x18] sm:$0xff]
        %vm347 = vcmask 261120
        %v349 = vsel %vm347, %v335, 0
        %v352 = vsel %vm347, %v336, 0
        %v355 = vsel %vm347, %v337, 0
        %v358 = vsel %vm347, %v338, 0
        %v361 = vsel %vm347, %v339, 0
        %v364 = vsel %vm347, %v340, 0
        %v367 = vsel %vm347, %v341, 0
        %v370 = vsel %vm347, %v342, 0
        %372 = vmatprep.subr.mxu0 0.0
        %373 = vmatpush1.msra.mxu0 %v343
        %374 = vmatprep.subr.mxu0 0.0
        %375 = vmatpush1.msra.mxu0 %v344
        %376 = vmatprep.subr.mxu0 0.0
        %377 = vmatpush1.msra.mxu0 %v345
        %378 = vmatprep.subr.mxu0 0.0
        %379 = vmatpush1.msra.mxu0 %v346
        %380 = vmatprep.subr.mxu0 0.0
        %381 = vmatpush1.msra.mxu0 0.0
        %382 = vmatprep.subr.mxu0 0.0
        %383 = vmatpush1.msra.mxu0 0.0
        %384 = vmatprep.subr.mxu0 0.0
        %385 = vmatpush1.msra.mxu0 0.0
        %386 = vmatprep.subr.mxu0 0.0
        %387 = vmatpush1.msra.mxu0 0.0
        %388 = vmatprep.subr.mxu0 0.0
        %389 = vmatpush1.msra.mxu0 0.0
        %390 = vmatprep.subr.mxu0 0.0
        %391 = vmatpush1.msra.mxu0 0.0
        %392 = vmatprep.subr.mxu0 0.0
        %393 = vmatpush1.msra.mxu0 0.0
        %394 = vmatprep.subr.mxu0 0.0
        %395 = vmatpush1.msra.mxu0 0.0
        %396 = vmatprep.subr.mxu0 0.0
        %397 = vmatpush1.msra.mxu0 0.0
        %398 = vmatprep.subr.mxu0 0.0
        %399 = vmatpush1.msra.mxu0 0.0
        %400 = vmatprep.subr.mxu0 0.0
        %401 = vmatpush1.msra.mxu0 0.0
        %402 = vmatprep.subr.mxu0 0.0
        %403 = vmatpush1.msra.mxu0 0.0
        %404 = vmatprep.subr.mxu0 0.0
        %405 = vmatpush1.msra.mxu0 0.0
        %406 = vmatprep.subr.mxu0 0.0
        %407 = vmatpush1.msra.mxu0 0.0
        %408 = vmatprep.subr.mxu0 0.0
        %409 = vmatpush1.msra.mxu0 0.0
        %410 = vmatprep.subr.mxu0 0.0
        %411 = vmatpush1.msra.mxu0 0.0
        %412 = vmatprep.subr.mxu0 0.0
        %413 = vmatpush1.msra.mxu0 0.0
        %414 = vmatprep.subr.mxu0 0.0
        %415 = vmatpush1.msra.mxu0 0.0
        %416 = vmatprep.subr.mxu0 0.0
        %417 = vmatpush1.msra.mxu0 0.0
        %418 = vmatprep.subr.mxu0 0.0
        %419 = vmatpush1.msra.mxu0 0.0
        %420 = vmatprep.subr.mxu0 0.0
        %421 = vmatpush1.msra.mxu0 0.0
        %422 = vmatprep.subr.mxu0 0.0
        %423 = vmatpush1.msra.mxu0 0.0
        %424 = vmatprep.subr.mxu0 0.0
        %425 = vmatpush1.msra.mxu0 0.0
        %426 = vmatprep.subr.mxu0 0.0
        %427 = vmatpush1.msra.mxu0 0.0
        %428 = vmatprep.subr.mxu0 0.0
        %429 = vmatpush1.msra.mxu0 0.0
        %430 = vmatprep.subr.mxu0 0.0
        %431 = vmatpush1.msra.mxu0 0.0
        %432 = vmatprep.subr.mxu0 0.0
        %433 = vmatpush1.msra.mxu0 0.0
        %434 = vmatprep.subr.mxu0 0.0
        %435 = vmatpush1.msra.mxu0 0.0
        %436 = vmatprep.mubr.f32.mxu0 0.0
        %437 = vmatmul.mubr.f32.gmra.mrb[0].mxu0 %v349
        %v438 = vpop.f32.mrb[0].mxu0
        %v439 = vadd.f32 0.0, %v438
        %v440 = vpop.f32.mrb[0].mxu0
        %441 = vmatprep.mubr.f32.mxu0 0.0
        %442 = vmatmul.mubr.f32.gmra.mrb[0].mxu0 %v352
        %v443 = vpop.f32.mrb[0].mxu0
        %v444 = vadd.f32 0.0, %v443
        %v445 = vpop.f32.mrb[0].mxu0
        %446 = vmatprep.mubr.f32.mxu0 0.0
        %447 = vmatmul.mubr.f32.gmra.mrb[0].mxu0 %v355
        %v448 = vpop.f32.mrb[0].mxu0
        %v449 = vadd.f32 0.0, %v448
        %v450 = vpop.f32.mrb[0].mxu0
        %451 = vmatprep.mubr.f32.mxu0 0.0
        %452 = vmatmul.mubr.f32.gmra.mrb[0].mxu0 %v358
        %v453 = vpop.f32.mrb[0].mxu0
        %v454 = vadd.f32 0.0, %v453
        %v455 = vpop.f32.mrb[0].mxu0
        %456 = vmatprep.mubr.f32.mxu0 0.0
        %457 = vmatmul.mubr.f32.gmra.mrb[0].mxu0 %v361
        %v458 = vpop.f32.mrb[0].mxu0
        %v459 = vadd.f32 0.0, %v458
        %v460 = vpop.f32.mrb[0].mxu0
        %461 = vmatprep.mubr.f32.mxu0 0.0
        %462 = vmatmul.mubr.f32.gmra.mrb[0].mxu0 %v364
        %v463 = vpop.f32.mrb[0].mxu0
        %v464 = vadd.f32 0.0, %v463
        %v465 = vpop.f32.mrb[0].mxu0
        %466 = vmatprep.mubr.f32.mxu0 0.0
        %467 = vmatmul.mubr.f32.gmra.mrb[0].mxu0 %v367
        %v468 = vpop.f32.mrb[0].mxu0
        %v469 = vadd.f32 0.0, %v468
        %v470 = vpop.f32.mrb[0].mxu0
        %471 = vmatprep.mubr.f32.mxu0 0.0
        %472 = vmatmul.mubr.f32.gmra.mrb[0].mxu0 %v370
        %v473 = vpop.f32.mrb[0].mxu0
        %v474 = vadd.f32 0.0, %v473
        %v475 = vpop.f32.mrb[0].mxu0
        %476 = vdwg.mxu0
        %v477 = vld [vmem:[%s329] sm:$0x1]
        %v479 = vlaneseq
        %v480 = vshrl.u32 %v479, 7
        %v481 = vsub.s32 0, %v480
        %v482 = vrot.slane %v477, %v481
        %v484 = vadd.f32 %v439, %v482
        %v485 = vadd.f32 %v444, %v482
        %v486 = vadd.f32 %v449, %v482
        %v487 = vadd.f32 %v454, %v482
        %v488 = vadd.f32 %v459, %v482
        %v489 = vadd.f32 %v464, %v482
        %v490 = vadd.f32 %v469, %v482
        %v491 = vadd.f32 %v474, %v482
        %v492 = vmul.f32 %v484, 0.5
        %v493 = vmul.f32 %v485, 0.5
        %v494 = vmul.f32 %v486, 0.5
        %v495 = vmul.f32 %v487, 0.5
        %v496 = vmul.f32 %v488, 0.5
        %v497 = vmul.f32 %v489, 0.5
        %v498 = vmul.f32 %v490, 0.5
        %v499 = vmul.f32 %v491, 0.5
        %v500 = vmul.f32 %v484, 0.70710677
        %v501 = vmul.f32 %v485, 0.70710677
        %v502 = vmul.f32 %v486, 0.70710677
        %v503 = vmul.f32 %v487, 0.70710677
        %v504 = vmul.f32 %v488, 0.70710677
        %v505 = vmul.f32 %v489, 0.70710677
        %v506 = vmul.f32 %v490, 0.70710677
        %v507 = vmul.f32 %v491, 0.70710677
        %v508 = verf.f32.pop %v500
        %v509 = verf.f32.pop %v501
        %v510 = verf.f32.pop %v502
        %v511 = verf.f32.pop %v503
        %v512 = verf.f32.pop %v504
        %v513 = verf.f32.pop %v505
        %v514 = verf.f32.pop %v506
        %v515 = verf.f32.pop %v507
        %v516 = vadd.f32 %v508, 1.0
        %v517 = vadd.f32 %v509, 1.0
        %v518 = vadd.f32 %v510, 1.0
        %v519 = vadd.f32 %v511, 1.0
        %v520 = vadd.f32 %v512, 1.0
        %v521 = vadd.f32 %v513, 1.0
        %v522 = vadd.f32 %v514, 1.0
        %v523 = vadd.f32 %v515, 1.0
        %v524 = vmul.f32 %v492, %v516
        %v525 = vmul.f32 %v493, %v517
        %v526 = vmul.f32 %v494, %v518
        %v527 = vmul.f32 %v495, %v519
        %v528 = vmul.f32 %v496, %v520
        %v529 = vmul.f32 %v497, %v521
        %v530 = vmul.f32 %v498, %v522
        %v531 = vmul.f32 %v499, %v523
        %v532 = vld [vmem:[%s3] sm:$0xff]
        %v533 = vld [vmem:[%s3 + $0x8] sm:$0xff]
        %v534 = vld [vmem:[%s3 + $0x10] sm:$0xff]
        %v535 = vld [vmem:[%s3 + $0x18] sm:$0xff]
        %v536 = vld [vmem:[%s3 + $0x20] sm:$0xff]
        %v537 = vld [vmem:[%s3 + $0x28] sm:$0xff]
        %v538 = vld [vmem:[%s3 + $0x30] sm:$0xff]
        %v539 = vld [vmem:[%s3 + $0x38] sm:$0xff]
        %v540 = vld [vmem:[#allocation2] sm:$0x1]
        %v542 = vlaneseq
        %v543 = vshrl.u32 %v542, 7
        %v544 = vsub.s32 0, %v543
        %v545 = vrot.slane %v540, %v544
        %vm547 = vcmask 523264
        %v549 = vsel %vm547, %v524, 0
        %v552 = vsel %vm547, %v525, 0
        %v555 = vsel %vm547, %v526, 0
        %v558 = vsel %vm547, %v527, 0
        %v561 = vsel %vm547, %v528, 0
        %v564 = vsel %vm547, %v529, 0
        %v567 = vsel %vm547, %v530, 0
        %v570 = vsel %vm547, %v531, 0
        %572 = vmatprep.subr.mxu0 0.0
        %573 = vmatpush1.msra.mxu0 %v532
        %574 = vmatprep.subr.mxu0 0.0
        %575 = vmatpush1.msra.mxu0 %v533
        %576 = vmatprep.subr.mxu0 0.0
        %577 = vmatpush1.msra.mxu0 %v534
        %578 = vmatprep.subr.mxu0 0.0
        %579 = vmatpush1.msra.mxu0 %v535
        %580 = vmatprep.subr.mxu0 0.0
        %581 = vmatpush1.msra.mxu0 %v536
        %582 = vmatprep.subr.mxu0 0.0
        %583 = vmatpush1.msra.mxu0 %v537
        %584 = vmatprep.subr.mxu0 0.0
        %585 = vmatpush1.msra.mxu0 %v538
        %586 = vmatprep.subr.mxu0 0.0
        %587 = vmatpush1.msra.mxu0 %v539
        %588 = vmatprep.subr.mxu0 0.0
        %589 = vmatpush1.msra.mxu0 0.0
        %590 = vmatprep.subr.mxu0 0.0
        %591 = vmatpush1.msra.mxu0 0.0
        %592 = vmatprep.subr.mxu0 0.0
        %593 = vmatpush1.msra.mxu0 0.0
        %594 = vmatprep.subr.mxu0 0.0
        %595 = vmatpush1.msra.mxu0 0.0
        %596 = vmatprep.subr.mxu0 0.0
        %597 = vmatpush1.msra.mxu0 0.0
        %598 = vmatprep.subr.mxu0 0.0
        %599 = vmatpush1.msra.mxu0 0.0
        %600 = vmatprep.subr.mxu0 0.0
        %601 = vmatpush1.msra.mxu0 0.0
        %602 = vmatprep.subr.mxu0 0.0
        %603 = vmatpush1.msra.mxu0 0.0
        %604 = vmatprep.subr.mxu0 0.0
        %605 = vmatpush1.msra.mxu0 0.0
        %606 = vmatprep.subr.mxu0 0.0
        %607 = vmatpush1.msra.mxu0 0.0
        %608 = vmatprep.subr.mxu0 0.0
        %609 = vmatpush1.msra.mxu0 0.0
        %610 = vmatprep.subr.mxu0 0.0
        %611 = vmatpush1.msra.mxu0 0.0
        %612 = vmatprep.subr.mxu0 0.0
        %613 = vmatpush1.msra.mxu0 0.0
        %614 = vmatprep.subr.mxu0 0.0
        %615 = vmatpush1.msra.mxu0 0.0
        %616 = vmatprep.subr.mxu0 0.0
        %617 = vmatpush1.msra.mxu0 0.0
        %618 = vmatprep.subr.mxu0 0.0
        %619 = vmatpush1.msra.mxu0 0.0
        %620 = vmatprep.subr.mxu0 0.0
        %621 = vmatpush1.msra.mxu0 0.0
        %622 = vmatprep.subr.mxu0 0.0
        %623 = vmatpush1.msra.mxu0 0.0
        %624 = vmatprep.subr.mxu0 0.0
        %625 = vmatpush1.msra.mxu0 0.0
        %626 = vmatprep.subr.mxu0 0.0
        %627 = vmatpush1.msra.mxu0 0.0
        %628 = vmatprep.subr.mxu0 0.0
        %629 = vmatpush1.msra.mxu0 0.0
        %630 = vmatprep.subr.mxu0 0.0
        %631 = vmatpush1.msra.mxu0 0.0
        %632 = vmatprep.subr.mxu0 0.0
        %633 = vmatpush1.msra.mxu0 0.0
        %634 = vmatprep.subr.mxu0 0.0
        %635 = vmatpush1.msra.mxu0 0.0
        %636 = vmatprep.mubr.f32.mxu0 0.0
        %637 = vmatmul.mubr.f32.gmra.mrb[0].mxu0 %v549
        %v638 = vpop.f32.mrb[0].mxu0
        %v639 = vadd.f32 %v545, %v638
        %v640 = vpop.f32.mrb[0].mxu0
        %641 = vmatprep.mubr.f32.mxu0 0.0
        %642 = vmatmul.mubr.f32.gmra.mrb[0].mxu0 %v552
        %v643 = vpop.f32.mrb[0].mxu0
        %v644 = vadd.f32 %v545, %v643
        %v645 = vpop.f32.mrb[0].mxu0
        %646 = vmatprep.mubr.f32.mxu0 0.0
        %647 = vmatmul.mubr.f32.gmra.mrb[0].mxu0 %v555
        %v648 = vpop.f32.mrb[0].mxu0
        %v649 = vadd.f32 %v545, %v648
        %v650 = vpop.f32.mrb[0].mxu0
        %651 = vmatprep.mubr.f32.mxu0 0.0
        %652 = vmatmul.mubr.f32.gmra.mrb[0].mxu0 %v558
        %v653 = vpop.f32.mrb[0].mxu0
        %v654 = vadd.f32 %v545, %v653
        %v655 = vpop.f32.mrb[0].mxu0
        %656 = vmatprep.mubr.f32.mxu0 0.0
        %657 = vmatmul.mubr.f32.gmra.mrb[0].mxu0 %v561
        %v658 = vpop.f32.mrb[0].mxu0
        %v659 = vadd.f32 %v545, %v658
        %v660 = vpop.f32.mrb[0].mxu0
        %661 = vmatprep.mubr.f32.mxu0 0.0
        %662 = vmatmul.mubr.f32.gmra.mrb[0].mxu0 %v564
        %v663 = vpop.f32.mrb[0].mxu0
        %v664 = vadd.f32 %v545, %v663
        %v665 = vpop.f32.mrb[0].mxu0
        %666 = vmatprep.mubr.f32.mxu0 0.0
        %667 = vmatmul.mubr.f32.gmra.mrb[0].mxu0 %v567
        %v668 = vpop.f32.mrb[0].mxu0
        %v669 = vadd.f32 %v545, %v668
        %v670 = vpop.f32.mrb[0].mxu0
        %671 = vmatprep.mubr.f32.mxu0 0.0
        %672 = vmatmul.mubr.f32.gmra.mrb[0].mxu0 %v570
        %v673 = vpop.f32.mrb[0].mxu0
        %v674 = vadd.f32 %v545, %v673
        %v675 = vpop.f32.mrb[0].mxu0
        %676 = vdwg.mxu0
        %v677 = vld [vmem:[%s4] sm:$0xff]
        %v678 = vld [vmem:[%s4 + $0x8] sm:$0xff]
        %v679 = vld [vmem:[%s4 + $0x10] sm:$0xff]
        %v680 = vld [vmem:[%s4 + $0x18] sm:$0xff]
        %v681 = vld [vmem:[%s4 + $0x20] sm:$0xff]
        %v682 = vld [vmem:[%s4 + $0x28] sm:$0xff]
        %v683 = vld [vmem:[%s4 + $0x30] sm:$0xff]
        %v684 = vld [vmem:[%s4 + $0x38] sm:$0xff]
        %v685 = vld [vmem:[%s6] sm:$0x1]
        %v687 = vlaneseq
        %v688 = vshrl.u32 %v687, 7
        %v689 = vsub.s32 0, %v688
        %v690 = vrot.slane %v685, %v689
        %692 = vmatprep.subr.mxu0 0.0
        %693 = vmatpush1.msra.mxu0 %v677
        %694 = vmatprep.subr.mxu0 0.0
        %695 = vmatpush1.msra.mxu0 %v678
        %696 = vmatprep.subr.mxu0 0.0
        %697 = vmatpush1.msra.mxu0 %v679
        %698 = vmatprep.subr.mxu0 0.0
        %699 = vmatpush1.msra.mxu0 %v680
        %700 = vmatprep.subr.mxu0 0.0
        %701 = vmatpush1.msra.mxu0 %v681
        %702 = vmatprep.subr.mxu0 0.0
        %703 = vmatpush1.msra.mxu0 %v682
        %704 = vmatprep.subr.mxu0 0.0
        %705 = vmatpush1.msra.mxu0 %v683
        %706 = vmatprep.subr.mxu0 0.0
        %707 = vmatpush1.msra.mxu0 %v684
        %708 = vmatprep.subr.mxu0 0.0
        %709 = vmatpush1.msra.mxu0 0.0
        %710 = vmatprep.subr.mxu0 0.0
        %711 = vmatpush1.msra.mxu0 0.0
        %712 = vmatprep.subr.mxu0 0.0
        %713 = vmatpush1.msra.mxu0 0.0
        %714 = vmatprep.subr.mxu0 0.0
        %715 = vmatpush1.msra.mxu0 0.0
        %716 = vmatprep.subr.mxu0 0.0
        %717 = vmatpush1.msra.mxu0 0.0
        %718 = vmatprep.subr.mxu0 0.0
        %719 = vmatpush1.msra.mxu0 0.0
        %720 = vmatprep.subr.mxu0 0.0
        %721 = vmatpush1.msra.mxu0 0.0
        %722 = vmatprep.subr.mxu0 0.0
        %723 = vmatpush1.msra.mxu0 0.0
        %724 = vmatprep.subr.mxu0 0.0
        %725 = vmatpush1.msra.mxu0 0.0
        %726 = vmatprep.subr.mxu0 0.0
        %727 = vmatpush1.msra.mxu0 0.0
        %728 = vmatprep.subr.mxu0 0.0
        %729 = vmatpush1.msra.mxu0 0.0
        %730 = vmatprep.subr.mxu0 0.0
        %731 = vmatpush1.msra.mxu0 0.0
        %732 = vmatprep.subr.mxu0 0.0
        %733 = vmatpush1.msra.mxu0 0.0
        %734 = vmatprep.subr.mxu0 0.0
        %735 = vmatpush1.msra.mxu0 0.0
        %736 = vmatprep.subr.mxu0 0.0
        %737 = vmatpush1.msra.mxu0 0.0
        %738 = vmatprep.subr.mxu0 0.0
        %739 = vmatpush1.msra.mxu0 0.0
        %740 = vmatprep.subr.mxu0 0.0
        %741 = vmatpush1.msra.mxu0 0.0
        %742 = vmatprep.subr.mxu0 0.0
        %743 = vmatpush1.msra.mxu0 0.0
        %744 = vmatprep.subr.mxu0 0.0
        %745 = vmatpush1.msra.mxu0 0.0
        %746 = vmatprep.subr.mxu0 0.0
        %747 = vmatpush1.msra.mxu0 0.0
        %748 = vmatprep.subr.mxu0 0.0
        %749 = vmatpush1.msra.mxu0 0.0
        %750 = vmatprep.subr.mxu0 0.0
        %751 = vmatpush1.msra.mxu0 0.0
        %752 = vmatprep.subr.mxu0 0.0
        %753 = vmatpush1.msra.mxu0 0.0
        %754 = vmatprep.subr.mxu0 0.0
        %755 = vmatpush1.msra.mxu0 0.0
        %756 = vmatprep.mubr.f32.mxu0 0.0
        %757 = vmatmul.mubr.f32.gmra.mrb[0].mxu0 %v549
        %v758 = vpop.f32.mrb[0].mxu0
        %v759 = vadd.f32 %v690, %v758
        %v760 = vpop.f32.mrb[0].mxu0
        %761 = vmatprep.mubr.f32.mxu0 0.0
        %762 = vmatmul.mubr.f32.gmra.mrb[0].mxu0 %v552
        %v763 = vpop.f32.mrb[0].mxu0
        %v764 = vadd.f32 %v690, %v763
        %v765 = vpop.f32.mrb[0].mxu0
        %766 = vmatprep.mubr.f32.mxu0 0.0
        %767 = vmatmul.mubr.f32.gmra.mrb[0].mxu0 %v555
        %v768 = vpop.f32.mrb[0].mxu0
        %v769 = vadd.f32 %v690, %v768
        %v770 = vpop.f32.mrb[0].mxu0
        %771 = vmatprep.mubr.f32.mxu0 0.0
        %772 = vmatmul.mubr.f32.gmra.mrb[0].mxu0 %v558
        %v773 = vpop.f32.mrb[0].mxu0
        %v774 = vadd.f32 %v690, %v773
        %v775 = vpop.f32.mrb[0].mxu0
        %776 = vmatprep.mubr.f32.mxu0 0.0
        %777 = vmatmul.mubr.f32.gmra.mrb[0].mxu0 %v561
        %v778 = vpop.f32.mrb[0].mxu0
        %v779 = vadd.f32 %v690, %v778
        %v780 = vpop.f32.mrb[0].mxu0
        %781 = vmatprep.mubr.f32.mxu0 0.0
        %782 = vmatmul.mubr.f32.gmra.mrb[0].mxu0 %v564
        %v783 = vpop.f32.mrb[0].mxu0
        %v784 = vadd.f32 %v690, %v783
        %v785 = vpop.f32.mrb[0].mxu0
        %786 = vmatprep.mubr.f32.mxu0 0.0
        %787 = vmatmul.mubr.f32.gmra.mrb[0].mxu0 %v567
        %v788 = vpop.f32.mrb[0].mxu0
        %v789 = vadd.f32 %v690, %v788
        %v790 = vpop.f32.mrb[0].mxu0
        %791 = vmatprep.mubr.f32.mxu0 0.0
        %792 = vmatmul.mubr.f32.gmra.mrb[0].mxu0 %v570
        %v793 = vpop.f32.mrb[0].mxu0
        %v794 = vadd.f32 %v690, %v793
        %v795 = vpop.f32.mrb[0].mxu0
        %796 = vdwg.mxu0
        %vm797 = vcmask 7168
        %798 = vst.msk [vmem:[%s334] sm:$0xff] %vm797, %v639
        %799 = vst.msk [vmem:[%s334 + $0x8] sm:$0xff] %vm797, %v644
        %800 = vst.msk [vmem:[%s334 + $0x10] sm:$0xff] %vm797, %v649
        %801 = vst.msk [vmem:[%s334 + $0x18] sm:$0xff] %vm797, %v654
        %802 = vst.msk [vmem:[%s334 + $0x20] sm:$0xff] %vm797, %v659
        %803 = vst.msk [vmem:[%s334 + $0x28] sm:$0xff] %vm797, %v664
        %804 = vst.msk [vmem:[%s334 + $0x30] sm:$0xff] %vm797, %v669
        %805 = vst.msk [vmem:[%s334 + $0x38] sm:$0xff] %vm797, %v674
        %806 = vst.msk [vmem:[%s320] sm:$0xff] %vm547, %v759
        %807 = vst.msk [vmem:[%s320 + $0x8] sm:$0xff] %vm547, %v764
        %808 = vst.msk [vmem:[%s320 + $0x10] sm:$0xff] %vm547, %v769
        %809 = vst.msk [vmem:[%s320 + $0x18] sm:$0xff] %vm547, %v774
        %810 = vst.msk [vmem:[%s320 + $0x20] sm:$0xff] %vm547, %v779
        %811 = vst.msk [vmem:[%s320 + $0x28] sm:$0xff] %vm547, %v784
        %812 = vst.msk [vmem:[%s320 + $0x30] sm:$0xff] %vm547, %v789
        %813 = vst.msk [vmem:[%s320 + $0x38] sm:$0xff] %vm547, %v794
        %p814 = scmp.lt.s32.totalorder %s25, 1
        %s815 = scalar_select %p814, %s25, 1
        %s816 = smul.addr %s815, 8
        %s817 = smul.addr %s816, 8
        %s818 = scalar_lea.vmem %s7, %s817
        %s819 = sand.u32 %s216, 1
        %s820 = scalar_lea.sflag [#allocation4], %s819
        %s821 = sand.u32 %s216, 1
        %s822 = smul.addr %s821, 64
        %s823 = scalar_lea.vmem [#allocation3], %s822
        // Predicated region
        $region49: #{tpu_custom_call.1} parent=47 // pred_check
          %p824 = pneg %p200
        $region50: #{tpu_custom_call.1} parent=47 // pred_check_branch
          %826 = sbr.rel (%p824) target = $region52
        $region51: #{tpu_custom_call.1} parent=47 // pred_region
          _
        $region52: #{tpu_custom_call.1} parent=47 // pred_fallthru
          _
        // Predicated region
        $region53: #{tpu_custom_call.1} parent=47 // pred_check
          %p827 = pneg %p226
        $region54: #{tpu_custom_call.1} parent=47 // pred_check_branch
          %829 = sbr.rel (%p827) target = $region56
        $region55: #{tpu_custom_call.1} parent=47 // pred_region
          %s831 = ssub.s32 1024, 1024
          %832 = vsyncadd %s820, %s831
          %s833 = smul.addr %s25, 8
          %s834 = smul.addr %s833, 128
          %s835 = scalar_lea.hbm %s8, %s834
          %s836 = sshll.u32 %s823, 4
          %s837 = int_to_ptr.vmem [resolvable:$true] %s836
          %842 = dma.vmem_to_hbm [thread:$0]  %s837, 1024, %s835, %s820, 128, 128, 8
        $region56: #{tpu_custom_call.1} parent=47 // pred_fallthru
          _
      $region48: #{tpu_custom_call.1} parent=5 // pred_fallthru
        _
      %p843 = scmp.le.s32.totalorder 2, %s20
      // Predicated region
      $region57: #{tpu_custom_call.1} parent=5 // pred_check
        %p844 = pneg %p843
      $region58: #{tpu_custom_call.1} parent=5 // pred_check_branch
        %846 = sbr.rel (%p844) target = $region60
      $region59: #{tpu_custom_call.1} parent=5 // pred_region
        %s847 = ssub.s32 %s20, 2
        // Predicated region
        $region61: #{tpu_custom_call.1} parent=59 // pred_check
          %p848 = pneg %p206
        $region62: #{tpu_custom_call.1} parent=59 // pred_check_branch
          %850 = sbr.rel (%p848) target = $region64
        $region63: #{tpu_custom_call.1} parent=59 // pred_region
          %p851 = scmp.lt.s32.totalorder %s26, 1
          %s852 = scalar_select %p851, %s26, 1
          %s853 = smul.addr %s852, 8
          %s854 = smul.addr %s853, 8
          %s855 = scalar_lea.vmem %s7, %s854
        $region64: #{tpu_custom_call.1} parent=59 // pred_fallthru
          _
        // Predicated region
        $region65: #{tpu_custom_call.1} parent=59 // pred_check
          %p856 = pneg %p232
        $region66: #{tpu_custom_call.1} parent=59 // pred_check_branch
          %858 = sbr.rel (%p856) target = $region68
        $region67: #{tpu_custom_call.1} parent=59 // pred_region
          %s859 = sand.u32 %s217, 1
          %s860 = scalar_lea.sflag [#allocation4], %s859
          %s861 = sand.u32 %s217, 1
          %s862 = smul.addr %s861, 64
          %s863 = scalar_lea.vmem [#allocation3], %s862
          %864 = dma.done %s860, 1024
        $region68: #{tpu_custom_call.1} parent=59 // pred_fallthru
          _
      $region60: #{tpu_custom_call.1} parent=5 // pred_fallthru
        _
    $region6: #{tpu_custom_call.1} parent=1 // loop_footer
      %s24 = sadd.s32 1, %s20
    $region7: #{tpu_custom_call.1} parent=1 // loop_footer_branch
      %19 = sbr.rel target = $region3
    $region8: #{tpu_custom_call.1} parent=1 // loop_exit
      _
    %865 = vsyncpa [#allocation4], 1
    %s866 = scalar_lea.sflag [#allocation4], 1
    %867 = vsyncpa %s866, 1

</llo_original>
